<compile_context>
chip_gen: v5e
topology: v5e:2x2
jax: 0.10.0
libtpu: 0.0.40
codegen_flags: <defaults>
</compile_context>

<pallas_src>
import functools

import jax
import jax.numpy as jnp
from jax import lax
from jax.experimental import pallas as pl
from jax.experimental.pallas import tpu as pltpu


_LANE = 128  # channel padding granularity (TPU lane width)


def _round_up(x, m):
    return (x + m - 1) // m * m


def _dwsep_kernel(x_ref, wdw_ref, bdw_ref, wpw_ref, bpw_ref, o_ref,
                  *, stride, tile_h, w_out):
    # x_ref:   (Hp, Wp, Cin_p)     whole padded image of one batch element
    #                              (block index is constant across the row-tile
    #                               grid axis -> stays resident, no re-DMA)
    # wdw_ref: (3, 3, Cin_p)       depthwise weights (BN scale folded), f32
    # bdw_ref: (1, 1, Cin_p)       depthwise effective bias, f32
    # wpw_ref: (Cin_p, Cout_p)     pointwise weights (BN scale folded), bf16
    # bpw_ref: (1, Cout_p)         pointwise effective bias, f32
    # o_ref:   (tile_h, W_out, Cout_p)
    t = pl.program_id(1)
    row0 = pl.multiple_of(t * (tile_h * stride), tile_h * stride)
    cin_p = x_ref.shape[-1]

    wdw = wdw_ref[...]                        # (3, 3, Cin_p) f32

    span_h = (tile_h - 1) * stride + 1
    span_w = (w_out - 1) * stride + 1

    # Depthwise 3x3: unrolled 9-tap MAC; each tap is read straight from the
    # ref (strip-sized accumulator, no whole-image value slicing).
    acc = jnp.zeros((tile_h, w_out, cin_p), jnp.float32)
    for kh in range(3):
        for kw in range(3):
            patch = x_ref[pl.ds(row0 + kh, span_h), pl.ds(kw, span_w), :]
            patch = patch.astype(jnp.float32)
            if stride > 1:
                # TODO(synk): stride>1 falls back to a strided value slice per
                # tap; a strided ref read on the sublane (W) axis would avoid
                # the temporary once that lowering is available.
                patch = patch[::stride, ::stride, :]
            acc = acc + patch * wdw[kh, kw, :]

    # Folded BN + ReLU (kept in f32 on the VPU).
    y = jnp.maximum(acc + bdw_ref[...], 0.0)          # (tile_h, w_out, Cin_p)

    # Pointwise 1x1 conv == channel matmul on the MXU.
    # bf16 operands, f32 accumulation (fewer MXU passes on v6e/v7x).
    y2 = y.reshape(tile_h * w_out, cin_p).astype(jnp.bfloat16)
    z = jnp.dot(y2, wpw_ref[...], preferred_element_type=jnp.float32)
    z = jnp.maximum(z + bpw_ref[...], 0.0)            # folded BN + ReLU
    o_ref[...] = z.reshape(tile_h, w_out, -1).astype(o_ref.dtype)


def _choose_tile_h(h_out, w_out, cin_p, budget_bytes=2 * 1024 * 1024):
    """Largest divisor of h_out whose f32 strip accumulator fits the budget,
    while leaving >= ~4 row tiles so the pipeline has steps to overlap."""
    max_rows = max(1, budget_bytes // (w_out * cin_p * 4))
    cap = min(max_rows, max(1, h_out // 4))
    tile_h = 1
    for th in range(1, h_out + 1):
        if h_out % th == 0 and th <= cap:
            tile_h = th
    return tile_h


def depthwise_separable_conv2d(x_nchw, params, *, stride=1, padding=1, eps=1e-5):
    """Pallas forward pass. Input/output are NCHW (PyTorch convention)."""
    w_dw = params["dw_weight"]   # (Cin, 1, 3, 3)
    b_dw = params["dw_bias"]     # (Cin,)
    w_pw = params["pw_weight"]   # (Cout, Cin, 1, 1)
    b_pw = params["pw_bias"]     # (Cout,)

    n, cin, h, w = x_nchw.shape
    cout = w_pw.shape[0]
    h_out = (h + 2 * padding - 3) // stride + 1
    w_out = (w + 2 * padding - 3) // stride + 1

    cin_p = _round_up(cin, _LANE)
    cout_p = _round_up(cout, _LANE)

    # Fold inference-mode BatchNorm into the conv weights/biases:
    #   BN(conv(x) + b) = conv(x) * s + ((b - mu) * s + beta),  s = g/sqrt(var+eps)
    s1 = params["bn1_gamma"] / jnp.sqrt(params["bn1_var"] + eps)
    wdw_f = (jnp.transpose(w_dw[:, 0], (1, 2, 0)) * s1).astype(jnp.float32)      # (3,3,Cin)
    bdw_f = ((b_dw - params["bn1_mean"]) * s1 + params["bn1_beta"]).astype(jnp.float32)
    s2 = params["bn2_gamma"] / jnp.sqrt(params["bn2_var"] + eps)
    wpw_f = (jnp.transpose(w_pw[:, :, 0, 0], (1, 0)) * s2).astype(jnp.float32)   # (Cin,Cout)
    bpw_f = ((b_pw - params["bn2_mean"]) * s2 + params["bn2_beta"]).astype(jnp.float32)

    # Lane-dense channel padding (sliced off after the call). Padded weight
    # rows/cols are zero, so padded channels contribute / emit exact zeros.
    wdw_f = jnp.pad(wdw_f, ((0, 0), (0, 0), (0, cin_p - cin)))
    bdw_f = jnp.pad(bdw_f, ((0, cin_p - cin),)).reshape(1, 1, cin_p)
    wpw_f = jnp.pad(wpw_f, ((0, cin_p - cin), (0, cout_p - cout))).astype(jnp.bfloat16)
    bpw_f = jnp.pad(bpw_f, ((0, cout_p - cout),)).reshape(1, cout_p)

    # NCHW -> NHWC; spatial halo padding and channel padding in a single pad.
    # TODO(synk): a fully NHWC producer/consumer pipeline would drop these two
    # transposes and fold the halo padding into boundary-masked taps in-kernel.
    x_nhwc = jnp.transpose(x_nchw, (0, 2, 3, 1))
    x_pad = jnp.pad(x_nhwc, ((0, 0), (padding, padding), (padding, padding),
                             (0, cin_p - cin)))
    hp, wp = x_pad.shape[1], x_pad.shape[2]

    tile_h = _choose_tile_h(h_out, w_out, cin_p)
    n_row_tiles = h_out // tile_h

    # VMEM budget: double-buffered blocks + strip intermediates, with margin,
    # capped at v7x's 64 MiB physical VMEM.
    est = (2 * (hp * wp * cin_p * 4                       # input block
                + tile_h * w_out * cout_p * 4             # output block
                + (9 + 1) * cin_p * 4 + cout_p * 4        # dw weights/biases
                + cin_p * cout_p * 2)                     # pw weights (bf16)
           + tile_h * w_out * (2 * cin_p * 4 + cin_p * 2 + cout_p * 4))
    vmem_limit = int(min(64 * 2**20, max(2 * est, 16 * 2**20)))

    kernel = functools.partial(_dwsep_kernel, stride=stride,
                               tile_h=tile_h, w_out=w_out)

    out_nhwc = pl.pallas_call(
        kernel,
        out_shape=jax.ShapeDtypeStruct((n, h_out, w_out, cout_p), x_nchw.dtype),
        grid_spec=pltpu.PrefetchScalarGridSpec(
            num_scalar_prefetch=0,
            grid=(n, n_row_tiles),                       # batch x row strips
            in_specs=[
                pl.BlockSpec((None, hp, wp, cin_p), lambda b, t: (b, 0, 0, 0)),
                pl.BlockSpec((3, 3, cin_p), lambda b, t: (0, 0, 0)),
                pl.BlockSpec((1, 1, cin_p), lambda b, t: (0, 0, 0)),
                pl.BlockSpec((cin_p, cout_p), lambda b, t: (0, 0)),
                pl.BlockSpec((1, cout_p), lambda b, t: (0, 0)),
            ],
            out_specs=pl.BlockSpec((None, tile_h, w_out, cout_p),
                                   lambda b, t: (b, t, 0, 0)),
        ),
        compiler_params=pltpu.CompilerParams(
            dimension_semantics=("parallel", "parallel"),
            vmem_limit_bytes=vmem_limit),
    )(x_pad, wdw_f, bdw_f, wpw_f, bpw_f)

    out_nhwc = out_nhwc[..., :cout]                      # drop Cout padding
    return jnp.transpose(out_nhwc, (0, 3, 1, 2))         # back to NCHW


def _reference(x, params, *, stride=1, padding=1, eps=1e-5):
    """Pure-JAX reference (lax.conv) for correctness checking."""
    cin = params["dw_weight"].shape[0]
    y = lax.conv_general_dilated(
        x, params["dw_weight"], (stride, stride),
        [(padding, padding), (padding, padding)],
        dimension_numbers=("NCHW", "OIHW", "NCHW"), feature_group_count=cin)
    y = y + params["dw_bias"][None, :, None, None]
    s1 = params["bn1_gamma"] / jnp.sqrt(params["bn1_var"] + eps)
    y = (y - params["bn1_mean"][None, :, None, None]) * s1[None, :, None, None] \
        + params["bn1_beta"][None, :, None, None]
    y = jnp.maximum(y, 0.0)

    z = lax.conv_general_dilated(
        y, params["pw_weight"], (1, 1), [(0, 0), (0, 0)],
        dimension_numbers=("NCHW", "OIHW", "NCHW"))
    z = z + params["pw_bias"][None, :, None, None]
    s2 = params["bn2_gamma"] / jnp.sqrt(params["bn2_var"] + eps)
    z = (z - params["bn2_mean"][None, :, None, None]) * s2[None, :, None, None] \
        + params["bn2_beta"][None, :, None, None]
    return jnp.maximum(z, 0.0)


if __name__ == "__main__":
    N, C_IN, C_OUT, H, W = 2, 4, 8, 16, 16
    STRIDE, PADDING = 1, 1

    key = jax.random.PRNGKey(0)
    keys = jax.random.split(key, 12)

    x = jax.random.normal(keys[0], (N, C_IN, H, W), jnp.float32)

    # Deterministic synthetic parameters (PyTorch parameter shapes).
    # TODO(synk): BatchNorm is implemented in inference mode (running stats),
    # not the training-mode batch-statistics path of nn.BatchNorm2d.
    params = {
        "dw_weight": jax.random.normal(keys[1], (C_IN, 1, 3, 3), jnp.float32) * 0.2,
        "dw_bias":   jax.random.normal(keys[2], (C_IN,), jnp.float32) * 0.1,
        "bn1_gamma": 0.5 + jax.random.uniform(keys[3], (C_IN,), jnp.float32),
        "bn1_beta":  jax.random.normal(keys[4], (C_IN,), jnp.float32) * 0.1,
        "bn1_mean":  jax.random.normal(keys[5], (C_IN,), jnp.float32) * 0.1,
        "bn1_var":   0.5 + jax.random.uniform(keys[6], (C_IN,), jnp.float32),
        "pw_weight": jax.random.normal(keys[7], (C_OUT, C_IN, 1, 1), jnp.float32) * 0.2,
        "pw_bias":   jax.random.normal(keys[8], (C_OUT,), jnp.float32) * 0.1,
        "bn2_gamma": 0.5 + jax.random.uniform(keys[9], (C_OUT,), jnp.float32),
        "bn2_beta":  jax.random.normal(keys[10], (C_OUT,), jnp.float32) * 0.1,
        "bn2_mean":  jax.random.normal(keys[11], (C_OUT,), jnp.float32) * 0.1,
        "bn2_var":   0.5 + jax.random.uniform(keys[0], (C_OUT,), jnp.float32),
    }

    out = depthwise_separable_conv2d(x, params, stride=STRIDE, padding=PADDING)
    out = jax.block_until_ready(out)

    ref = jax.block_until_ready(_reference(x, params, stride=STRIDE, padding=PADDING))
    assert out.shape == (N, C_OUT, H, W), out.shape
    # bf16 MXU operands (f32 accumulation) -> ~1e-2 relative tolerance vs f32 ref.
    assert jnp.allclose(out, ref, atol=2e-2, rtol=2e-2), float(jnp.max(jnp.abs(out - ref)))

    print("KERNEL_OK")
</pallas_src>

<mosaic_0001>
module attributes {stable_mosaic.version = 11 : i64} {
  func.func @_dwsep_kernel(%arg0: i32, %arg1: i32, %arg2: memref<1x18x18x128xf32, #tpu.memory_space<vmem>>, %arg3: memref<3x3x128xf32, #tpu.memory_space<vmem>>, %arg4: memref<1x1x128xf32, #tpu.memory_space<vmem>>, %arg5: memref<128x128xbf16, #tpu.memory_space<vmem>>, %arg6: memref<1x128xf32, #tpu.memory_space<vmem>>, %arg7: memref<1x4x16x128xf32, #tpu.memory_space<vmem>>) attributes {dimension_semantics = [#tpu.dimension_semantics<parallel>, #tpu.dimension_semantics<parallel>], iteration_bounds = array<i64: 2, 4>, scalar_prefetch = 0 : i64, scratch_operands = 0 : i64, tpu.core_type = #tpu.core_type<tc>, window_params = [{transform_indices = @transform_0, window_bounds = array<i64: 1, 18, 18, 128>}, {pipeline_mode = #tpu.pipeline_mode<synchronous>, transform_indices = @transform_1, window_bounds = array<i64: 3, 3, 128>}, {pipeline_mode = #tpu.pipeline_mode<synchronous>, transform_indices = @transform_2, window_bounds = array<i64: 1, 1, 128>}, {pipeline_mode = #tpu.pipeline_mode<synchronous>, transform_indices = @transform_3, window_bounds = array<i64: 128, 128>}, {pipeline_mode = #tpu.pipeline_mode<synchronous>, transform_indices = @transform_4, window_bounds = array<i64: 1, 128>}, {transform_indices = @transform_5, window_bounds = array<i64: 1, 4, 16, 128>}]} {
    %c4_i32 = arith.constant 4 : i32
    %0 = arith.muli %arg1, %c4_i32 : i32
    %1 = tpu.assume_multiple %0, 4 : i32
    %c0 = arith.constant 0 : index
    %c0_0 = arith.constant 0 : index
    %c0_1 = arith.constant 0 : index
    %2 = vector.load %arg3[%c0, %c0_0, %c0_1] : memref<3x3x128xf32, #tpu.memory_space<vmem>>, vector<3x3x128xf32>
    %cst = arith.constant 0.000000e+00 : f32
    %3 = vector.broadcast %cst : f32 to vector<4x16x128xf32>
    %c0_i32 = arith.constant 0 : i32
    %4 = arith.addi %1, %c0_i32 : i32
    %c0_2 = arith.constant 0 : index
    %5 = arith.index_cast %4 : i32 to index
    %c0_3 = arith.constant 0 : index
    %c0_4 = arith.constant 0 : index
    %6 = vector.load %arg2[%c0_2, %5, %c0_3, %c0_4] : memref<1x18x18x128xf32, #tpu.memory_space<vmem>>, vector<1x4x16x128xf32>
    %7 = vector.shape_cast %6 : vector<1x4x16x128xf32> to vector<4x16x128xf32>
    %8 = vector.extract_strided_slice %2 {offsets = [0, 0, 0], sizes = [1, 1, 128], strides = [1, 1, 1]} : vector<3x3x128xf32> to vector<1x1x128xf32>
    %9 = vector.shape_cast %8 : vector<1x1x128xf32> to vector<128xf32>
    %10 = vector.shape_cast %9 : vector<128xf32> to vector<1x1x128xf32>
    %11 = vector.broadcast %10 : vector<1x1x128xf32> to vector<4x16x128xf32>
    %12 = arith.mulf %7, %11 : vector<4x16x128xf32>
    %13 = arith.addf %3, %12 : vector<4x16x128xf32>
    %c0_i32_5 = arith.constant 0 : i32
    %14 = arith.addi %1, %c0_i32_5 : i32
    %c0_6 = arith.constant 0 : index
    %15 = arith.index_cast %14 : i32 to index
    %c1 = arith.constant 1 : index
    %c0_7 = arith.constant 0 : index
    %16 = vector.load %arg2[%c0_6, %15, %c1, %c0_7] : memref<1x18x18x128xf32, #tpu.memory_space<vmem>>, vector<1x4x16x128xf32>
    %17 = vector.shape_cast %16 : vector<1x4x16x128xf32> to vector<4x16x128xf32>
    %18 = vector.extract_strided_slice %2 {offsets = [0, 1, 0], sizes = [1, 1, 128], strides = [1, 1, 1]} : vector<3x3x128xf32> to vector<1x1x128xf32>
    %19 = vector.shape_cast %18 : vector<1x1x128xf32> to vector<128xf32>
    %20 = vector.shape_cast %19 : vector<128xf32> to vector<1x1x128xf32>
    %21 = vector.broadcast %20 : vector<1x1x128xf32> to vector<4x16x128xf32>
    %22 = arith.mulf %17, %21 : vector<4x16x128xf32>
    %23 = arith.addf %13, %22 : vector<4x16x128xf32>
    %c0_i32_8 = arith.constant 0 : i32
    %24 = arith.addi %1, %c0_i32_8 : i32
    %c0_9 = arith.constant 0 : index
    %25 = arith.index_cast %24 : i32 to index
    %c2 = arith.constant 2 : index
    %c0_10 = arith.constant 0 : index
    %26 = vector.load %arg2[%c0_9, %25, %c2, %c0_10] : memref<1x18x18x128xf32, #tpu.memory_space<vmem>>, vector<1x4x16x128xf32>
    %27 = vector.shape_cast %26 : vector<1x4x16x128xf32> to vector<4x16x128xf32>
    %28 = vector.extract_strided_slice %2 {offsets = [0, 2, 0], sizes = [1, 1, 128], strides = [1, 1, 1]} : vector<3x3x128xf32> to vector<1x1x128xf32>
    %29 = vector.shape_cast %28 : vector<1x1x128xf32> to vector<128xf32>
    %30 = vector.shape_cast %29 : vector<128xf32> to vector<1x1x128xf32>
    %31 = vector.broadcast %30 : vector<1x1x128xf32> to vector<4x16x128xf32>
    %32 = arith.mulf %27, %31 : vector<4x16x128xf32>
    %33 = arith.addf %23, %32 : vector<4x16x128xf32>
    %c1_i32 = arith.constant 1 : i32
    %34 = arith.addi %1, %c1_i32 : i32
    %c0_11 = arith.constant 0 : index
    %35 = arith.index_cast %34 : i32 to index
    %c0_12 = arith.constant 0 : index
    %c0_13 = arith.constant 0 : index
    %36 = vector.load %arg2[%c0_11, %35, %c0_12, %c0_13] : memref<1x18x18x128xf32, #tpu.memory_space<vmem>>, vector<1x4x16x128xf32>
    %37 = vector.shape_cast %36 : vector<1x4x16x128xf32> to vector<4x16x128xf32>
    %38 = vector.extract_strided_slice %2 {offsets = [1, 0, 0], sizes = [1, 1, 128], strides = [1, 1, 1]} : vector<3x3x128xf32> to vector<1x1x128xf32>
    %39 = vector.shape_cast %38 : vector<1x1x128xf32> to vector<128xf32>
    %40 = vector.shape_cast %39 : vector<128xf32> to vector<1x1x128xf32>
    %41 = vector.broadcast %40 : vector<1x1x128xf32> to vector<4x16x128xf32>
    %42 = arith.mulf %37, %41 : vector<4x16x128xf32>
    %43 = arith.addf %33, %42 : vector<4x16x128xf32>
    %c1_i32_14 = arith.constant 1 : i32
    %44 = arith.addi %1, %c1_i32_14 : i32
    %c0_15 = arith.constant 0 : index
    %45 = arith.index_cast %44 : i32 to index
    %c1_16 = arith.constant 1 : index
    %c0_17 = arith.constant 0 : index
    %46 = vector.load %arg2[%c0_15, %45, %c1_16, %c0_17] : memref<1x18x18x128xf32, #tpu.memory_space<vmem>>, vector<1x4x16x128xf32>
    %47 = vector.shape_cast %46 : vector<1x4x16x128xf32> to vector<4x16x128xf32>
    %48 = vector.extract_strided_slice %2 {offsets = [1, 1, 0], sizes = [1, 1, 128], strides = [1, 1, 1]} : vector<3x3x128xf32> to vector<1x1x128xf32>
    %49 = vector.shape_cast %48 : vector<1x1x128xf32> to vector<128xf32>
    %50 = vector.shape_cast %49 : vector<128xf32> to vector<1x1x128xf32>
    %51 = vector.broadcast %50 : vector<1x1x128xf32> to vector<4x16x128xf32>
    %52 = arith.mulf %47, %51 : vector<4x16x128xf32>
    %53 = arith.addf %43, %52 : vector<4x16x128xf32>
    %c1_i32_18 = arith.constant 1 : i32
    %54 = arith.addi %1, %c1_i32_18 : i32
    %c0_19 = arith.constant 0 : index
    %55 = arith.index_cast %54 : i32 to index
    %c2_20 = arith.constant 2 : index
    %c0_21 = arith.constant 0 : index
    %56 = vector.load %arg2[%c0_19, %55, %c2_20, %c0_21] : memref<1x18x18x128xf32, #tpu.memory_space<vmem>>, vector<1x4x16x128xf32>
    %57 = vector.shape_cast %56 : vector<1x4x16x128xf32> to vector<4x16x128xf32>
    %58 = vector.extract_strided_slice %2 {offsets = [1, 2, 0], sizes = [1, 1, 128], strides = [1, 1, 1]} : vector<3x3x128xf32> to vector<1x1x128xf32>
    %59 = vector.shape_cast %58 : vector<1x1x128xf32> to vector<128xf32>
    %60 = vector.shape_cast %59 : vector<128xf32> to vector<1x1x128xf32>
    %61 = vector.broadcast %60 : vector<1x1x128xf32> to vector<4x16x128xf32>
    %62 = arith.mulf %57, %61 : vector<4x16x128xf32>
    %63 = arith.addf %53, %62 : vector<4x16x128xf32>
    %c2_i32 = arith.constant 2 : i32
    %64 = arith.addi %1, %c2_i32 : i32
    %c0_22 = arith.constant 0 : index
    %65 = arith.index_cast %64 : i32 to index
    %c0_23 = arith.constant 0 : index
    %c0_24 = arith.constant 0 : index
    %66 = vector.load %arg2[%c0_22, %65, %c0_23, %c0_24] : memref<1x18x18x128xf32, #tpu.memory_space<vmem>>, vector<1x4x16x128xf32>
    %67 = vector.shape_cast %66 : vector<1x4x16x128xf32> to vector<4x16x128xf32>
    %68 = vector.extract_strided_slice %2 {offsets = [2, 0, 0], sizes = [1, 1, 128], strides = [1, 1, 1]} : vector<3x3x128xf32> to vector<1x1x128xf32>
    %69 = vector.shape_cast %68 : vector<1x1x128xf32> to vector<128xf32>
    %70 = vector.shape_cast %69 : vector<128xf32> to vector<1x1x128xf32>
    %71 = vector.broadcast %70 : vector<1x1x128xf32> to vector<4x16x128xf32>
    %72 = arith.mulf %67, %71 : vector<4x16x128xf32>
    %73 = arith.addf %63, %72 : vector<4x16x128xf32>
    %c2_i32_25 = arith.constant 2 : i32
    %74 = arith.addi %1, %c2_i32_25 : i32
    %c0_26 = arith.constant 0 : index
    %75 = arith.index_cast %74 : i32 to index
    %c1_27 = arith.constant 1 : index
    %c0_28 = arith.constant 0 : index
    %76 = vector.load %arg2[%c0_26, %75, %c1_27, %c0_28] : memref<1x18x18x128xf32, #tpu.memory_space<vmem>>, vector<1x4x16x128xf32>
    %77 = vector.shape_cast %76 : vector<1x4x16x128xf32> to vector<4x16x128xf32>
    %78 = vector.extract_strided_slice %2 {offsets = [2, 1, 0], sizes = [1, 1, 128], strides = [1, 1, 1]} : vector<3x3x128xf32> to vector<1x1x128xf32>
    %79 = vector.shape_cast %78 : vector<1x1x128xf32> to vector<128xf32>
    %80 = vector.shape_cast %79 : vector<128xf32> to vector<1x1x128xf32>
    %81 = vector.broadcast %80 : vector<1x1x128xf32> to vector<4x16x128xf32>
    %82 = arith.mulf %77, %81 : vector<4x16x128xf32>
    %83 = arith.addf %73, %82 : vector<4x16x128xf32>
    %c2_i32_29 = arith.constant 2 : i32
    %84 = arith.addi %1, %c2_i32_29 : i32
    %c0_30 = arith.constant 0 : index
    %85 = arith.index_cast %84 : i32 to index
    %c2_31 = arith.constant 2 : index
    %c0_32 = arith.constant 0 : index
    %86 = vector.load %arg2[%c0_30, %85, %c2_31, %c0_32] : memref<1x18x18x128xf32, #tpu.memory_space<vmem>>, vector<1x4x16x128xf32>
    %87 = vector.shape_cast %86 : vector<1x4x16x128xf32> to vector<4x16x128xf32>
    %88 = vector.extract_strided_slice %2 {offsets = [2, 2, 0], sizes = [1, 1, 128], strides = [1, 1, 1]} : vector<3x3x128xf32> to vector<1x1x128xf32>
    %89 = vector.shape_cast %88 : vector<1x1x128xf32> to vector<128xf32>
    %90 = vector.shape_cast %89 : vector<128xf32> to vector<1x1x128xf32>
    %91 = vector.broadcast %90 : vector<1x1x128xf32> to vector<4x16x128xf32>
    %92 = arith.mulf %87, %91 : vector<4x16x128xf32>
    %93 = arith.addf %83, %92 : vector<4x16x128xf32>
    %c0_33 = arith.constant 0 : index
    %c0_34 = arith.constant 0 : index
    %c0_35 = arith.constant 0 : index
    %94 = vector.load %arg4[%c0_33, %c0_34, %c0_35] : memref<1x1x128xf32, #tpu.memory_space<vmem>>, vector<1x1x128xf32>
    %95 = vector.broadcast %94 : vector<1x1x128xf32> to vector<4x16x128xf32>
    %96 = arith.addf %93, %95 : vector<4x16x128xf32>
    %cst_36 = arith.constant 0.000000e+00 : f32
    %97 = vector.broadcast %cst_36 : f32 to vector<4x16x128xf32>
    %98 = arith.maximumf %96, %97 : vector<4x16x128xf32>
    %99 = vector.shape_cast %98 : vector<4x16x128xf32> to vector<64x128xf32>
    %100 = arith.truncf %99 : vector<64x128xf32> to vector<64x128xbf16>
    %c0_37 = arith.constant 0 : index
    %c0_38 = arith.constant 0 : index
    %101 = vector.load %arg5[%c0_37, %c0_38] : memref<128x128xbf16, #tpu.memory_space<vmem>>, vector<128x128xbf16>
    %cst_39 = arith.constant dense<0.000000e+00> : vector<64x128xf32>
    %102 = tpu.matmul %100, %101, %cst_39 {dimension_numbers = #tpu.dot_dimension_numbers<[1], [0], [0], [1], [0, 0, 1, 1], [], []>} : vector<64x128xbf16>, vector<128x128xbf16>, vector<64x128xf32> -> vector<64x128xf32>
    %c0_40 = arith.constant 0 : index
    %c0_41 = arith.constant 0 : index
    %103 = vector.load %arg6[%c0_40, %c0_41] : memref<1x128xf32, #tpu.memory_space<vmem>>, vector<1x128xf32>
    %104 = vector.broadcast %103 : vector<1x128xf32> to vector<64x128xf32>
    %105 = arith.addf %102, %104 : vector<64x128xf32>
    %cst_42 = arith.constant 0.000000e+00 : f32
    %106 = vector.broadcast %cst_42 : f32 to vector<64x128xf32>
    %107 = arith.maximumf %105, %106 : vector<64x128xf32>
    %108 = vector.shape_cast %107 : vector<64x128xf32> to vector<4x16x128xf32>
    %c0_43 = arith.constant 0 : index
    %c0_44 = arith.constant 0 : index
    %c0_45 = arith.constant 0 : index
    %c0_46 = arith.constant 0 : index
    %109 = vector.load %arg7[%c0_43, %c0_44, %c0_45, %c0_46] : memref<1x4x16x128xf32, #tpu.memory_space<vmem>>, vector<1x4x16x128xf32>
    %110 = vector.shape_cast %109 : vector<1x4x16x128xf32> to vector<4x16x128xf32>
    %111 = vector.shape_cast %108 : vector<4x16x128xf32> to vector<1x4x16x128xf32>
    tpu.vector_store %arg7[%c0_43, %c0_44, %c0_45, %c0_46], %111 {strides = array<i32>} : memref<1x4x16x128xf32, #tpu.memory_space<vmem>>, vector<1x4x16x128xf32>,
    return
  }
  func.func @transform_0(%arg0: i32, %arg1: i32) -> (i32, i32, i32, i32) {
    %c0_i32 = arith.constant 0 : i32
    %c0_i32_0 = arith.constant 0 : i32
    %c0_i32_1 = arith.constant 0 : i32
    %c0_i32_2 = arith.constant 0 : i32
    return %arg0, %c0_i32, %c0_i32_0, %c0_i32_1 : i32, i32, i32, i32
  }
  func.func @transform_1(%arg0: i32, %arg1: i32) -> (i32, i32, i32) {
    %c0_i32 = arith.constant 0 : i32
    %c0_i32_0 = arith.constant 0 : i32
    %c0_i32_1 = arith.constant 0 : i32
    %c0_i32_2 = arith.constant 0 : i32
    return %c0_i32, %c0_i32_0, %c0_i32_1 : i32, i32, i32
  }
  func.func @transform_2(%arg0: i32, %arg1: i32) -> (i32, i32, i32) {
    %c0_i32 = arith.constant 0 : i32
    %c0_i32_0 = arith.constant 0 : i32
    %c0_i32_1 = arith.constant 0 : i32
    %c0_i32_2 = arith.constant 0 : i32
    return %c0_i32, %c0_i32_0, %c0_i32_1 : i32, i32, i32
  }
  func.func @transform_3(%arg0: i32, %arg1: i32) -> (i32, i32) {
    %c0_i32 = arith.constant 0 : i32
    %c0_i32_0 = arith.constant 0 : i32
    %c0_i32_1 = arith.constant 0 : i32
    return %c0_i32, %c0_i32_0 : i32, i32
  }
  func.func @transform_4(%arg0: i32, %arg1: i32) -> (i32, i32) {
    %c0_i32 = arith.constant 0 : i32
    %c0_i32_0 = arith.constant 0 : i32
    %c0_i32_1 = arith.constant 0 : i32
    return %c0_i32, %c0_i32_0 : i32, i32
  }
  func.func @transform_5(%arg0: i32, %arg1: i32) -> (i32, i32, i32, i32) {
    %c0_i32 = arith.constant 0 : i32
    %c0_i32_0 = arith.constant 0 : i32
    %c0_i32_1 = arith.constant 0 : i32
    return %arg0, %arg1, %c0_i32, %c0_i32_0 : i32, i32, i32, i32
  }
}

</mosaic_0001>

<llo_original>
// kernel: tpu_custom_call.1
$region0: #{tpu_custom_call.1}
  #allocation0 [shape = 'u32[]', space=smem, size = 0x4, offset = 0x4, fixed_abs, tag = 'smem constant byte address 0x4 - core index']
  #allocation1 [shape = 'u32[72,128]{1,0:T(1,128)}', space=vmem, size = 0x9000, scoped, tag = 'internal scratch']
  %s0 = inlined_call_operand.vmem [shape: f32[2,18,18,128], index: 0, kind: input, shape index: {}]
  %s1 = inlined_call_operand.vmem [shape: f32[3,3,128], index: 1, kind: input, shape index: {}]
  %s2 = inlined_call_operand.vmem [shape: f32[1,1,128], index: 2, kind: input, shape index: {}]
  %s3 = inlined_call_operand.vmem [shape: bf16[128,128], index: 3, kind: input, shape index: {}]
  %s4 = inlined_call_operand.vmem [shape: f32[1,128], index: 4, kind: input, shape index: {}]
  %s5 = inlined_call_operand.hbm [shape: f32[2,16,16,128], index: 5, kind: output, shape index: {}]
  %s6 = sld [smem:[#allocation0]]
  $region53: #{tpu_custom_call.1} parent=0
    _
  %s8 = ssub.s32 1, %s6
  %s9 = scalar_select 0, %s8, %s6
  $region1: #{tpu_custom_call.1} parent=0
    #allocation2 [shape = 'u8[65536]{0}', space=vmem, size = 0x10000, scoped, tag = 'output window, operand 0']
    #allocation3 [shape = 's32[2]{0}', space=sflag, size = 0x8, scoped, tag = 'scoped memory for tpu_custom_call.1']
    %10 = vsyncpa [#allocation3], 0
    %s11 = scalar_lea.sflag [#allocation3], 1
    %12 = vsyncpa %s11, 0
    loop: start=0, step=1, limit=10
    $region2: #{tpu_custom_call.1} parent=1 // loop_pre_header
      _
    $region3: #{tpu_custom_call.1} parent=1 // loop_header
      %s14 = sphi 0, %s18
      %p15 = scmp.ge.s32.totalorder %s14, 10
      %s21 = sphi 0, %s33
      %s22 = sphi 0, %s29
      %s23 = sphi 0, %s21
      %s24 = sphi 0, %s22
      %s25 = sphi 0, %s23
      %s26 = sphi 0, %s24
      %s36 = sphi 0, %s38
      %s39 = sphi 0, %s36
      %s40 = sphi 0, %s39
      %s56 = sphi 0, %s40
      %s60 = sphi 0, %s60
      %s62 = sphi 0, %s60
      %s63 = sphi 0, %s62
      %s77 = sphi 0, %s63
      %s81 = sphi 0, %s81
      %s83 = sphi 0, %s81
      %s84 = sphi 0, %s83
      %s98 = sphi 0, %s84
      %s102 = sphi 0, %s102
      %s104 = sphi 0, %s102
      %s105 = sphi 0, %s104
      %s119 = sphi 0, %s105
      %s123 = sphi 0, %s123
      %s125 = sphi 0, %s123
      %s126 = sphi 0, %s125
      %s140 = sphi 0, %s126
      %s148 = sphi 0, %s150
      %s151 = sphi 0, %s148
      %s152 = sphi 0, %s151
      %s168 = sphi 0, %s152
    $region4: #{tpu_custom_call.1} parent=1 // loop_header_branch
      %17 = sbr.rel (%p15) target = $region8
    $region5: #{tpu_custom_call.1} parent=1 // loop_body
      %s19 = ssub.s32 %s14, 1
      %s20 = ssub.s32 %s14, 2
      %s27 = sadd.s32 1, %s22
      %p28 = scmp.ge.s32.totalorder %s27, 4
      %s29 = scalar_select %p28, 0, %s27
      %s30 = sadd.s32 1, %s21
      %s31 = scalar_select %p28, %s30, %s21
      %p32 = scmp.ge.s32.totalorder %s31, 2
      %s33 = scalar_select %p32, 0, %s31
      %s34 = ssub.s32 %s21, %s33
      %p35 = scmp.eq.s32.totalorder %s34, 0
      %s37 = sadd.s32 %s36, 1
      %s38 = scalar_select %p35, %s36, %s37
      %p41 = pneg %p35
      %p42 = scmp.eq.s32.totalorder %s14, 7
      %p43 = por %p41, %p42
      %p44 = scmp.ne.s32.totalorder %s36, %s39
      %p45 = scmp.eq.s32.totalorder %s14, 0
      %p46 = por %p44, %p45
      %p47 = scmp.ne.s32.totalorder %s36, %s39
      %p48 = scmp.eq.s32.totalorder %s19, 7
      %p49 = por %p47, %p48
      %p50 = scmp.ne.s32.totalorder %s39, %s40
      %p51 = scmp.eq.s32.totalorder %s19, 0
      %p52 = por %p50, %p51
      %p53 = scmp.ne.s32.totalorder %s39, %s40
      %p54 = scmp.eq.s32.totalorder %s20, 7
      %p55 = por %p53, %p54
      %p57 = scmp.ne.s32.totalorder %s40, %s56
      %p58 = scmp.eq.s32.totalorder %s20, 0
      %p59 = por %p57, %p58
      %s61 = sadd.s32 %s60, 1
      %p64 = scmp.eq.s32.totalorder %s14, 7
      %p65 = scmp.ne.s32.totalorder %s60, %s62
      %p66 = scmp.eq.s32.totalorder %s14, 0
      %p67 = por %p65, %p66
      %p68 = scmp.ne.s32.totalorder %s60, %s62
      %p69 = scmp.eq.s32.totalorder %s19, 7
      %p70 = por %p68, %p69
      %p71 = scmp.ne.s32.totalorder %s62, %s63
      %p72 = scmp.eq.s32.totalorder %s19, 0
      %p73 = por %p71, %p72
      %p74 = scmp.ne.s32.totalorder %s62, %s63
      %p75 = scmp.eq.s32.totalorder %s20, 7
      %p76 = por %p74, %p75
      %p78 = scmp.ne.s32.totalorder %s63, %s77
      %p79 = scmp.eq.s32.totalorder %s20, 0
      %p80 = por %p78, %p79
      %s82 = sadd.s32 %s81, 1
      %p85 = scmp.eq.s32.totalorder %s14, 7
      %p86 = scmp.ne.s32.totalorder %s81, %s83
      %p87 = scmp.eq.s32.totalorder %s14, 0
      %p88 = por %p86, %p87
      %p89 = scmp.ne.s32.totalorder %s81, %s83
      %p90 = scmp.eq.s32.totalorder %s19, 7
      %p91 = por %p89, %p90
      %p92 = scmp.ne.s32.totalorder %s83, %s84
      %p93 = scmp.eq.s32.totalorder %s19, 0
      %p94 = por %p92, %p93
      %p95 = scmp.ne.s32.totalorder %s83, %s84
      %p96 = scmp.eq.s32.totalorder %s20, 7
      %p97 = por %p95, %p96
      %p99 = scmp.ne.s32.totalorder %s84, %s98
      %p100 = scmp.eq.s32.totalorder %s20, 0
      %p101 = por %p99, %p100
      %s103 = sadd.s32 %s102, 1
      %p106 = scmp.eq.s32.totalorder %s14, 7
      %p107 = scmp.ne.s32.totalorder %s102, %s104
      %p108 = scmp.eq.s32.totalorder %s14, 0
      %p109 = por %p107, %p108
      %p110 = scmp.ne.s32.totalorder %s102, %s104
      %p111 = scmp.eq.s32.totalorder %s19, 7
      %p112 = por %p110, %p111
      %p113 = scmp.ne.s32.totalorder %s104, %s105
      %p114 = scmp.eq.s32.totalorder %s19, 0
      %p115 = por %p113, %p114
      %p116 = scmp.ne.s32.totalorder %s104, %s105
      %p117 = scmp.eq.s32.totalorder %s20, 7
      %p118 = por %p116, %p117
      %p120 = scmp.ne.s32.totalorder %s105, %s119
      %p121 = scmp.eq.s32.totalorder %s20, 0
      %p122 = por %p120, %p121
      %s124 = sadd.s32 %s123, 1
      %p127 = scmp.eq.s32.totalorder %s14, 7
      %p128 = scmp.ne.s32.totalorder %s123, %s125
      %p129 = scmp.eq.s32.totalorder %s14, 0
      %p130 = por %p128, %p129
      %p131 = scmp.ne.s32.totalorder %s123, %s125
      %p132 = scmp.eq.s32.totalorder %s19, 7
      %p133 = por %p131, %p132
      %p134 = scmp.ne.s32.totalorder %s125, %s126
      %p135 = scmp.eq.s32.totalorder %s19, 0
      %p136 = por %p134, %p135
      %p137 = scmp.ne.s32.totalorder %s125, %s126
      %p138 = scmp.eq.s32.totalorder %s20, 7
      %p139 = por %p137, %p138
      %p141 = scmp.ne.s32.totalorder %s126, %s140
      %p142 = scmp.eq.s32.totalorder %s20, 0
      %p143 = por %p141, %p142
      %s144 = ssub.s32 %s21, %s33
      %s145 = ssub.s32 %s22, %s29
      %s146 = sor.u32 %s144, %s145
      %p147 = scmp.eq.s32.totalorder %s146, 0
      %s149 = sadd.s32 %s148, 1
      %s150 = scalar_select %p147, %s148, %s149
      %p153 = pneg %p147
      %p154 = scmp.eq.s32.totalorder %s14, 7
      %p155 = por %p153, %p154
      %p156 = scmp.ne.s32.totalorder %s148, %s151
      %p157 = scmp.eq.s32.totalorder %s14, 0
      %p158 = por %p156, %p157
      %p159 = scmp.ne.s32.totalorder %s148, %s151
      %p160 = scmp.eq.s32.totalorder %s19, 7
      %p161 = por %p159, %p160
      %p162 = scmp.ne.s32.totalorder %s151, %s152
      %p163 = scmp.eq.s32.totalorder %s19, 0
      %p164 = por %p162, %p163
      %p165 = scmp.ne.s32.totalorder %s151, %s152
      %p166 = scmp.eq.s32.totalorder %s20, 7
      %p167 = por %p165, %p166
      %p169 = scmp.ne.s32.totalorder %s152, %s168
      %p170 = scmp.eq.s32.totalorder %s20, 0
      %p171 = por %p169, %p170
      %p172 = scmp.le.s32.totalorder 1, %s14
      %p173 = scmp.lt.s32.totalorder %s14, 9
      %p174 = pnand %p172, %p173
      %p175 = pneg %p174
      // Predicated region
      $region9: #{tpu_custom_call.1} parent=5 // pred_check
        _
      $region10: #{tpu_custom_call.1} parent=5 // pred_check_branch
        %177 = sbr.rel (%p174) target = $region12
      $region11: #{tpu_custom_call.1} parent=5 // pred_region
        %s178 = ssub.s32 %s14, 1
        // Predicated region
        $region13: #{tpu_custom_call.1} parent=11 // pred_check
          %p179 = pneg %p73
        $region14: #{tpu_custom_call.1} parent=11 // pred_check_branch
          %181 = sbr.rel (%p179) target = $region16
        $region15: #{tpu_custom_call.1} parent=11 // pred_region
          _
        $region16: #{tpu_custom_call.1} parent=11 // pred_fallthru
          _
        // Predicated region
        $region17: #{tpu_custom_call.1} parent=11 // pred_check
          %p182 = pneg %p94
        $region18: #{tpu_custom_call.1} parent=11 // pred_check_branch
          %184 = sbr.rel (%p182) target = $region20
        $region19: #{tpu_custom_call.1} parent=11 // pred_region
          _
        $region20: #{tpu_custom_call.1} parent=11 // pred_fallthru
          _
        // Predicated region
        $region21: #{tpu_custom_call.1} parent=11 // pred_check
          %p185 = pneg %p115
        $region22: #{tpu_custom_call.1} parent=11 // pred_check_branch
          %187 = sbr.rel (%p185) target = $region24
        $region23: #{tpu_custom_call.1} parent=11 // pred_region
          _
        $region24: #{tpu_custom_call.1} parent=11 // pred_fallthru
          _
        // Predicated region
        $region25: #{tpu_custom_call.1} parent=11 // pred_check
          %p188 = pneg %p136
        $region26: #{tpu_custom_call.1} parent=11 // pred_check_branch
          %190 = sbr.rel (%p188) target = $region28
        $region27: #{tpu_custom_call.1} parent=11 // pred_region
          _
        $region28: #{tpu_custom_call.1} parent=11 // pred_fallthru
          _
      $region12: #{tpu_custom_call.1} parent=5 // pred_fallthru
        _
      %p191 = scmp.lt.s32.totalorder %s14, 8
      // Predicated region
      $region29: #{tpu_custom_call.1} parent=5 // pred_check
        %p192 = pneg %p191
      $region30: #{tpu_custom_call.1} parent=5 // pred_check_branch
        %194 = sbr.rel (%p192) target = $region32
      $region31: #{tpu_custom_call.1} parent=5 // pred_region
        // Predicated region
        $region33: #{tpu_custom_call.1} parent=31 // pred_check
          %p195 = pneg %p46
        $region34: #{tpu_custom_call.1} parent=31 // pred_check_branch
          %197 = sbr.rel (%p195) target = $region36
        $region35: #{tpu_custom_call.1} parent=31 // pred_region
          %p198 = scmp.lt.s32.totalorder %s21, 1
          %s199 = scalar_select %p198, %s21, 1
          %s200 = smul.addr %s199, 54
          %s201 = smul.addr %s200, 8
          %s202 = scalar_lea.vmem %s0, %s201
        $region36: #{tpu_custom_call.1} parent=31 // pred_fallthru
          _
      $region32: #{tpu_custom_call.1} parent=5 // pred_fallthru
        _
      %p203 = scmp.le.s32.totalorder 1, %s14
      %p204 = scmp.lt.s32.totalorder %s14, 9
      %p205 = pnand %p203, %p204
      %p206 = pneg %p205
      // Predicated region
      $region37: #{tpu_custom_call.1} parent=5 // pred_check
        _
      $region38: #{tpu_custom_call.1} parent=5 // pred_check_branch
        %208 = sbr.rel (%p205) target = $region40
      $region39: #{tpu_custom_call.1} parent=5 // pred_region
        %s209 = ssub.s32 %s14, 1
        %p210 = scmp.lt.s32.totalorder %s23, 1
        %s211 = scalar_select %p210, %s23, 1
        %s212 = smul.addr %s211, 54
        %s213 = smul.addr %s212, 8
        %s214 = scalar_lea.vmem %s0, %s213
        %p215 = pneg %p52
        %p216 = pneg %p49
        %p217 = pneg %p73
        %p218 = pneg %p70
        %p219 = pneg %p94
        %p220 = pneg %p91
        %p221 = pneg %p115
        %p222 = pneg %p112
        %p223 = pneg %p136
        %p224 = pneg %p133
        %p225 = pneg %p164
        %p226 = pneg %p161
        %s227 = sand.u32 %s151, 1
        %s228 = scalar_lea.sflag [#allocation3], %s227
        %s229 = sand.u32 %s151, 1
        %s230 = smul.addr %s229, 64
        %s231 = scalar_lea.vmem [#allocation2], %s230
        %p232 = scmp.lt.s32.totalorder %s23, 1
        %s233 = scalar_select %p232, %s23, 1
        %s234 = smul.addr %s233, 54
        %s235 = smul.addr %s234, 8
        %s236 = scalar_lea.vmem %s0, %s235
        %s237 = smul.u32 4, %s24
        %s238 = smul.u32 %s24, 4
        %v239 = vld [vmem:[%s1] sm:$0x7]
        %v240 = vld [vmem:[%s1 + $0x4] sm:$0x7]
        %v241 = vld [vmem:[%s1 + $0x8] sm:$0x7]
        %s242 = smul.u32 %s238, 24
        %s243 = scalar_lea.vmem %s236, %s242
        %v244 = vld [vmem:[%s243] sm:$0xff]
        %v245 = vld [vmem:[%s243 + $0x8] sm:$0xff]
        %v246 = vld [vmem:[%s243 + $0x18] sm:$0xff]
        %v247 = vld [vmem:[%s243 + $0x20] sm:$0xff]
        %v248 = vld [vmem:[%s243 + $0x30] sm:$0xff]
        %v249 = vld [vmem:[%s243 + $0x38] sm:$0xff]
        %v250 = vld [vmem:[%s243 + $0x48] sm:$0xff]
        %v251 = vld [vmem:[%s243 + $0x50] sm:$0xff]
        %v252 = vperm.slane %v239, 0
        %v253 = vmul.f32 %v244, %v252
        %v254 = vmul.f32 %v245, %v252
        %v255 = vmul.f32 %v246, %v252
        %v256 = vmul.f32 %v247, %v252
        %v257 = vmul.f32 %v248, %v252
        %v258 = vmul.f32 %v249, %v252
        %v259 = vmul.f32 %v250, %v252
        %v260 = vmul.f32 %v251, %v252
        %v261 = vadd.f32 %v253, 0.0
        %v262 = vadd.f32 %v254, 0.0
        %v263 = vadd.f32 %v255, 0.0
        %v264 = vadd.f32 %v256, 0.0
        %v265 = vadd.f32 %v257, 0.0
        %v266 = vadd.f32 %v258, 0.0
        %v267 = vadd.f32 %v259, 0.0
        %v268 = vadd.f32 %v260, 0.0
        %v269 = vld [vmem:[%s243 + $0x1] sm:$0xff]
        %v270 = vld [vmem:[%s243 + $0x9] sm:$0xff]
        %v271 = vld [vmem:[%s243 + $0x19] sm:$0xff]
        %v272 = vld [vmem:[%s243 + $0x21] sm:$0xff]
        %v273 = vld [vmem:[%s243 + $0x31] sm:$0xff]
        %v274 = vld [vmem:[%s243 + $0x39] sm:$0xff]
        %v275 = vld [vmem:[%s243 + $0x49] sm:$0xff]
        %v276 = vld [vmem:[%s243 + $0x51] sm:$0xff]
        %v277 = vperm.slane %v239, 1
        %v278 = vmul.f32 %v269, %v277
        %v279 = vmul.f32 %v270, %v277
        %v280 = vmul.f32 %v271, %v277
        %v281 = vmul.f32 %v272, %v277
        %v282 = vmul.f32 %v273, %v277
        %v283 = vmul.f32 %v274, %v277
        %v284 = vmul.f32 %v275, %v277
        %v285 = vmul.f32 %v276, %v277
        %v286 = vadd.f32 %v261, %v278
        %v287 = vadd.f32 %v262, %v279
        %v288 = vadd.f32 %v263, %v280
        %v289 = vadd.f32 %v264, %v281
        %v290 = vadd.f32 %v265, %v282
        %v291 = vadd.f32 %v266, %v283
        %v292 = vadd.f32 %v267, %v284
        %v293 = vadd.f32 %v268, %v285
        %v294 = vld [vmem:[%s243 + $0x2] sm:$0xff]
        %v295 = vld [vmem:[%s243 + $0xa] sm:$0xff]
        %v296 = vld [vmem:[%s243 + $0x1a] sm:$0xff]
        %v297 = vld [vmem:[%s243 + $0x22] sm:$0xff]
        %v298 = vld [vmem:[%s243 + $0x32] sm:$0xff]
        %v299 = vld [vmem:[%s243 + $0x3a] sm:$0xff]
        %v300 = vld [vmem:[%s243 + $0x4a] sm:$0xff]
        %v301 = vld [vmem:[%s243 + $0x52] sm:$0xff]
        %v302 = vperm.slane %v239, 2
        %v303 = vmul.f32 %v294, %v302
        %v304 = vmul.f32 %v295, %v302
        %v305 = vmul.f32 %v296, %v302
        %v306 = vmul.f32 %v297, %v302
        %v307 = vmul.f32 %v298, %v302
        %v308 = vmul.f32 %v299, %v302
        %v309 = vmul.f32 %v300, %v302
        %v310 = vmul.f32 %v301, %v302
        %v311 = vadd.f32 %v286, %v303
        %v312 = vadd.f32 %v287, %v304
        %v313 = vadd.f32 %v288, %v305
        %v314 = vadd.f32 %v289, %v306
        %v315 = vadd.f32 %v290, %v307
        %v316 = vadd.f32 %v291, %v308
        %v317 = vadd.f32 %v292, %v309
        %v318 = vadd.f32 %v293, %v310
        %s319 = sadd.s32 %s238, 1
        %s320 = smul.u32 %s319, 24
        %s321 = scalar_lea.vmem %s236, %s320
        %v322 = vld [vmem:[%s321] sm:$0xff]
        %v323 = vld [vmem:[%s321 + $0x8] sm:$0xff]
        %v324 = vld [vmem:[%s321 + $0x18] sm:$0xff]
        %v325 = vld [vmem:[%s321 + $0x20] sm:$0xff]
        %v326 = vld [vmem:[%s321 + $0x30] sm:$0xff]
        %v327 = vld [vmem:[%s321 + $0x38] sm:$0xff]
        %v328 = vld [vmem:[%s321 + $0x48] sm:$0xff]
        %v329 = vld [vmem:[%s321 + $0x50] sm:$0xff]
        %v330 = vperm.slane %v240, 0
        %v331 = vmul.f32 %v322, %v330
        %v332 = vmul.f32 %v323, %v330
        %v333 = vmul.f32 %v324, %v330
        %v334 = vmul.f32 %v325, %v330
        %v335 = vmul.f32 %v326, %v330
        %v336 = vmul.f32 %v327, %v330
        %v337 = vmul.f32 %v328, %v330
        %v338 = vmul.f32 %v329, %v330
        %v339 = vadd.f32 %v311, %v331
        %v340 = vadd.f32 %v312, %v332
        %v341 = vadd.f32 %v313, %v333
        %v342 = vadd.f32 %v314, %v334
        %v343 = vadd.f32 %v315, %v335
        %v344 = vadd.f32 %v316, %v336
        %v345 = vadd.f32 %v317, %v337
        %v346 = vadd.f32 %v318, %v338
        %v347 = vld [vmem:[%s321 + $0x1] sm:$0xff]
        %v348 = vld [vmem:[%s321 + $0x9] sm:$0xff]
        %v349 = vld [vmem:[%s321 + $0x19] sm:$0xff]
        %v350 = vld [vmem:[%s321 + $0x21] sm:$0xff]
        %v351 = vld [vmem:[%s321 + $0x31] sm:$0xff]
        %v352 = vld [vmem:[%s321 + $0x39] sm:$0xff]
        %v353 = vld [vmem:[%s321 + $0x49] sm:$0xff]
        %v354 = vld [vmem:[%s321 + $0x51] sm:$0xff]
        %v355 = vperm.slane %v240, 1
        %v356 = vmul.f32 %v347, %v355
        %v357 = vmul.f32 %v348, %v355
        %v358 = vmul.f32 %v349, %v355
        %v359 = vmul.f32 %v350, %v355
        %v360 = vmul.f32 %v351, %v355
        %v361 = vmul.f32 %v352, %v355
        %v362 = vmul.f32 %v353, %v355
        %v363 = vmul.f32 %v354, %v355
        %v364 = vadd.f32 %v339, %v356
        %v365 = vadd.f32 %v340, %v357
        %v366 = vadd.f32 %v341, %v358
        %v367 = vadd.f32 %v342, %v359
        %v368 = vadd.f32 %v343, %v360
        %v369 = vadd.f32 %v344, %v361
        %v370 = vadd.f32 %v345, %v362
        %v371 = vadd.f32 %v346, %v363
        %v372 = vld [vmem:[%s321 + $0x2] sm:$0xff]
        %v373 = vld [vmem:[%s321 + $0xa] sm:$0xff]
        %v374 = vld [vmem:[%s321 + $0x1a] sm:$0xff]
        %v375 = vld [vmem:[%s321 + $0x22] sm:$0xff]
        %v376 = vld [vmem:[%s321 + $0x32] sm:$0xff]
        %v377 = vld [vmem:[%s321 + $0x3a] sm:$0xff]
        %v378 = vld [vmem:[%s321 + $0x4a] sm:$0xff]
        %v379 = vld [vmem:[%s321 + $0x52] sm:$0xff]
        %v380 = vperm.slane %v240, 2
        %v381 = vmul.f32 %v372, %v380
        %v382 = vmul.f32 %v373, %v380
        %v383 = vmul.f32 %v374, %v380
        %v384 = vmul.f32 %v375, %v380
        %v385 = vmul.f32 %v376, %v380
        %v386 = vmul.f32 %v377, %v380
        %v387 = vmul.f32 %v378, %v380
        %v388 = vmul.f32 %v379, %v380
        %v389 = vadd.f32 %v364, %v381
        %v390 = vadd.f32 %v365, %v382
        %v391 = vadd.f32 %v366, %v383
        %v392 = vadd.f32 %v367, %v384
        %v393 = vadd.f32 %v368, %v385
        %v394 = vadd.f32 %v369, %v386
        %v395 = vadd.f32 %v370, %v387
        %v396 = vadd.f32 %v371, %v388
        %s397 = sadd.s32 %s238, 2
        %s398 = smul.u32 %s397, 24
        %s399 = scalar_lea.vmem %s236, %s398
        %v400 = vld [vmem:[%s399] sm:$0xff]
        %v401 = vld [vmem:[%s399 + $0x8] sm:$0xff]
        %v402 = vld [vmem:[%s399 + $0x18] sm:$0xff]
        %v403 = vld [vmem:[%s399 + $0x20] sm:$0xff]
        %v404 = vld [vmem:[%s399 + $0x30] sm:$0xff]
        %v405 = vld [vmem:[%s399 + $0x38] sm:$0xff]
        %v406 = vld [vmem:[%s399 + $0x48] sm:$0xff]
        %v407 = vld [vmem:[%s399 + $0x50] sm:$0xff]
        %v408 = vperm.slane %v241, 0
        %v409 = vmul.f32 %v400, %v408
        %v410 = vmul.f32 %v401, %v408
        %v411 = vmul.f32 %v402, %v408
        %v412 = vmul.f32 %v403, %v408
        %v413 = vmul.f32 %v404, %v408
        %v414 = vmul.f32 %v405, %v408
        %v415 = vmul.f32 %v406, %v408
        %v416 = vmul.f32 %v407, %v408
        %v417 = vadd.f32 %v389, %v409
        %v418 = vadd.f32 %v390, %v410
        %v419 = vadd.f32 %v391, %v411
        %v420 = vadd.f32 %v392, %v412
        %v421 = vadd.f32 %v393, %v413
        %v422 = vadd.f32 %v394, %v414
        %v423 = vadd.f32 %v395, %v415
        %v424 = vadd.f32 %v396, %v416
        %v425 = vld [vmem:[%s399 + $0x1] sm:$0xff]
        %v426 = vld [vmem:[%s399 + $0x9] sm:$0xff]
        %v427 = vld [vmem:[%s399 + $0x19] sm:$0xff]
        %v428 = vld [vmem:[%s399 + $0x21] sm:$0xff]
        %v429 = vld [vmem:[%s399 + $0x31] sm:$0xff]
        %v430 = vld [vmem:[%s399 + $0x39] sm:$0xff]
        %v431 = vld [vmem:[%s399 + $0x49] sm:$0xff]
        %v432 = vld [vmem:[%s399 + $0x51] sm:$0xff]
        %v433 = vperm.slane %v241, 1
        %v434 = vmul.f32 %v425, %v433
        %v435 = vmul.f32 %v426, %v433
        %v436 = vmul.f32 %v427, %v433
        %v437 = vmul.f32 %v428, %v433
        %v438 = vmul.f32 %v429, %v433
        %v439 = vmul.f32 %v430, %v433
        %v440 = vmul.f32 %v431, %v433
        %v441 = vmul.f32 %v432, %v433
        %v442 = vadd.f32 %v417, %v434
        %v443 = vadd.f32 %v418, %v435
        %v444 = vadd.f32 %v419, %v436
        %v445 = vadd.f32 %v420, %v437
        %v446 = vadd.f32 %v421, %v438
        %v447 = vadd.f32 %v422, %v439
        %v448 = vadd.f32 %v423, %v440
        %v449 = vadd.f32 %v424, %v441
        %v450 = vld [vmem:[%s399 + $0x2] sm:$0xff]
        %v451 = vld [vmem:[%s399 + $0xa] sm:$0xff]
        %v452 = vld [vmem:[%s399 + $0x1a] sm:$0xff]
        %v453 = vld [vmem:[%s399 + $0x22] sm:$0xff]
        %v454 = vld [vmem:[%s399 + $0x32] sm:$0xff]
        %v455 = vld [vmem:[%s399 + $0x3a] sm:$0xff]
        %v456 = vld [vmem:[%s399 + $0x4a] sm:$0xff]
        %v457 = vld [vmem:[%s399 + $0x52] sm:$0xff]
        %v458 = vperm.slane %v241, 2
        %v459 = vmul.f32 %v450, %v458
        %v460 = vmul.f32 %v451, %v458
        %v461 = vmul.f32 %v452, %v458
        %v462 = vmul.f32 %v453, %v458
        %v463 = vmul.f32 %v454, %v458
        %v464 = vmul.f32 %v455, %v458
        %v465 = vmul.f32 %v456, %v458
        %v466 = vmul.f32 %v457, %v458
        %v467 = vadd.f32 %v442, %v459
        %v468 = vadd.f32 %v443, %v460
        %v469 = vadd.f32 %v444, %v461
        %v470 = vadd.f32 %v445, %v462
        %v471 = vadd.f32 %v446, %v463
        %v472 = vadd.f32 %v447, %v464
        %v473 = vadd.f32 %v448, %v465
        %v474 = vadd.f32 %v449, %v466
        %v475 = vld [vmem:[%s2] sm:$0x1]
        %v477 = vperm.slane %v475, 0
        %v479 = vadd.f32 %v467, %v477
        %v480 = vadd.f32 %v468, %v477
        %v481 = vadd.f32 %v469, %v477
        %v482 = vadd.f32 %v470, %v477
        %v483 = vadd.f32 %v471, %v477
        %v484 = vadd.f32 %v472, %v477
        %v485 = vadd.f32 %v473, %v477
        %v486 = vadd.f32 %v474, %v477
        %v487 = vmax.f32 %v479, 0.0
        %v488 = vmax.f32 %v480, 0.0
        %v489 = vmax.f32 %v481, 0.0
        %v490 = vmax.f32 %v482, 0.0
        %v491 = vmax.f32 %v483, 0.0
        %v492 = vmax.f32 %v484, 0.0
        %v493 = vmax.f32 %v485, 0.0
        %v494 = vmax.f32 %v486, 0.0
        %v495 = vpack.c.bf16 %v488, %v487
        %v496 = vpack.c.bf16 %v490, %v489
        %v497 = vpack.c.bf16 %v492, %v491
        %v498 = vpack.c.bf16 %v494, %v493
        %v499 = vld [vmem:[%s3] sm:$0xf]
        %v500 = vld [vmem:[%s3 + $0x4] sm:$0xf]
        %v501 = vld [vmem:[%s3 + $0x8] sm:$0xf]
        %v502 = vld [vmem:[%s3 + $0xc] sm:$0xf]
        %v503 = vld [vmem:[%s3 + $0x10] sm:$0xf]
        %v504 = vld [vmem:[%s3 + $0x14] sm:$0xf]
        %v505 = vld [vmem:[%s3 + $0x18] sm:$0xf]
        %v506 = vld [vmem:[%s3 + $0x1c] sm:$0xf]
        %v507 = vld [vmem:[%s3 + $0x20] sm:$0xf]
        %v508 = vld [vmem:[%s3 + $0x24] sm:$0xf]
        %v509 = vld [vmem:[%s3 + $0x28] sm:$0xf]
        %v510 = vld [vmem:[%s3 + $0x2c] sm:$0xf]
        %v511 = vld [vmem:[%s3 + $0x30] sm:$0xf]
        %v512 = vld [vmem:[%s3 + $0x34] sm:$0xf]
        %v513 = vld [vmem:[%s3 + $0x38] sm:$0xf]
        %v514 = vld [vmem:[%s3 + $0x3c] sm:$0xf]
        %v515 = vld [vmem:[%s4] sm:$0x1]
        %v517 = vperm.slane %v515, 0
        %v535 = vunpack.c.l.b16 %v499
        %v536 = vunpack.c.l.b16 %v500
        %v537 = vunpack.c.l.b16 %v501
        %v538 = vunpack.c.l.b16 %v502
        %v539 = vunpack.c.l.b16 %v503
        %v540 = vunpack.c.l.b16 %v504
        %v541 = vunpack.c.l.b16 %v505
        %v542 = vunpack.c.l.b16 %v506
        %v543 = vunpack.c.l.b16 %v507
        %v544 = vunpack.c.l.b16 %v508
        %v545 = vunpack.c.l.b16 %v509
        %v546 = vunpack.c.l.b16 %v510
        %v547 = vunpack.c.l.b16 %v511
        %v548 = vunpack.c.l.b16 %v512
        %v549 = vunpack.c.l.b16 %v513
        %v550 = vunpack.c.l.b16 %v514
        %v551 = vpack.c.b16 %v536, %v535
        %v552 = vpack.c.b16 %v538, %v537
        %v553 = vpack.c.b16 %v540, %v539
        %v554 = vpack.c.b16 %v542, %v541
        %v555 = vpack.c.b16 %v544, %v543
        %v556 = vpack.c.b16 %v546, %v545
        %v557 = vpack.c.b16 %v548, %v547
        %v558 = vpack.c.b16 %v550, %v549
        %567 = vmatpush.bf16.msra.mxu0 %v558
        %568 = vmatpush.bf16.msra.mxu0 %v557
        %569 = vmatpush.bf16.msra.mxu0 %v556
        %570 = vmatpush.bf16.msra.mxu0 %v555
        %571 = vmatpush.bf16.msra.mxu0 %v554
        %572 = vmatpush.bf16.msra.mxu0 %v553
        %573 = vmatpush.bf16.msra.mxu0 %v552
        %574 = vmatpush.bf16.msra.mxu0 %v551
        %575 = vmatmul.bf16.gmra.mxu0 %v495
        %v576 = vpop.f32.mrf.mxu0
        %v577 = vadd.f32 %v517, %v576
        %v578 = vpop.f32.mrf.mxu0
        %v579 = vadd.f32 %v517, %v578
        %580 = vmatmul.bf16.gmra.mxu0 %v496
        %v581 = vpop.f32.mrf.mxu0
        %v582 = vadd.f32 %v517, %v581
        %v583 = vpop.f32.mrf.mxu0
        %v584 = vadd.f32 %v517, %v583
        %585 = vmatmul.bf16.gmra.mxu0 %v497
        %v586 = vpop.f32.mrf.mxu0
        %v587 = vadd.f32 %v517, %v586
        %v588 = vpop.f32.mrf.mxu0
        %v589 = vadd.f32 %v517, %v588
        %590 = vmatmul.bf16.gmra.mxu0 %v498
        %v591 = vpop.f32.mrf.mxu0
        %v592 = vadd.f32 %v517, %v591
        %v593 = vpop.f32.mrf.mxu0
        %v594 = vadd.f32 %v517, %v593
        %595 = vdwg.mxu0
        %v596 = vmax.f32 %v577, 0.0
        %v597 = vmax.f32 %v579, 0.0
        %v598 = vmax.f32 %v582, 0.0
        %v599 = vmax.f32 %v584, 0.0
        %v600 = vmax.f32 %v587, 0.0
        %v601 = vmax.f32 %v589, 0.0
        %v602 = vmax.f32 %v592, 0.0
        %v603 = vmax.f32 %v594, 0.0
        %604 = vst [vmem:[%s231] sm:$0xff] %v596
        %605 = vst [vmem:[%s231 + $0x8] sm:$0xff] %v597
        %606 = vst [vmem:[%s231 + $0x10] sm:$0xff] %v598
        %607 = vst [vmem:[%s231 + $0x18] sm:$0xff] %v599
        %608 = vst [vmem:[%s231 + $0x20] sm:$0xff] %v600
        %609 = vst [vmem:[%s231 + $0x28] sm:$0xff] %v601
        %610 = vst [vmem:[%s231 + $0x30] sm:$0xff] %v602
        %611 = vst [vmem:[%s231 + $0x38] sm:$0xff] %v603
        %s612 = sand.u32 %s151, 1
        %s613 = scalar_lea.sflag [#allocation3], %s612
        %s614 = sand.u32 %s151, 1
        %s615 = smul.addr %s614, 64
        %s616 = scalar_lea.vmem [#allocation2], %s615
        // Predicated region
        $region41: #{tpu_custom_call.1} parent=39 // pred_check
          %p617 = pneg %p161
        $region42: #{tpu_custom_call.1} parent=39 // pred_check_branch
          %619 = sbr.rel (%p617) target = $region44
        $region43: #{tpu_custom_call.1} parent=39 // pred_region
          %s620 = smul.u32 4, %s24
          %622 = vsyncadd %s613, 0
          %s623 = smul.addr %s620, 2
          %s624 = smul.addr %s23, 32
          %s625 = sadd.s32 %s623, %s624
          %s626 = smul.addr %s625, 8
          %s627 = scalar_lea.hbm %s5, %s626
          %s628 = sshll.u32 %s616, 4
          %s629 = int_to_ptr.vmem [resolvable:$true] %s628
          %s630 = sshll.u32 %s627, 4
          %s631 = int_to_ptr.hbm [resolvable:$true] %s630
          %636 = dma.vmem_to_hbm [thread:$0]  %s629, 1024, %s631, %s613, 128, 128, 8
        $region44: #{tpu_custom_call.1} parent=39 // pred_fallthru
          _
      $region40: #{tpu_custom_call.1} parent=5 // pred_fallthru
        _
      %p637 = scmp.le.s32.totalorder 2, %s14
      // Predicated region
      $region45: #{tpu_custom_call.1} parent=5 // pred_check
        %p638 = pneg %p637
      $region46: #{tpu_custom_call.1} parent=5 // pred_check_branch
        %640 = sbr.rel (%p638) target = $region48
      $region47: #{tpu_custom_call.1} parent=5 // pred_region
        %s641 = ssub.s32 %s14, 2
        // Predicated region
        $region49: #{tpu_custom_call.1} parent=47 // pred_check
          %p642 = pneg %p167
        $region50: #{tpu_custom_call.1} parent=47 // pred_check_branch
          %644 = sbr.rel (%p642) target = $region52
        $region51: #{tpu_custom_call.1} parent=47 // pred_region
          %s645 = sand.u32 %s152, 1
          %s646 = scalar_lea.sflag [#allocation3], %s645
          %s647 = sand.u32 %s152, 1
          %s648 = smul.addr %s647, 64
          %s649 = scalar_lea.vmem [#allocation2], %s648
          %651 = dma.done %s646, 1024
        $region52: #{tpu_custom_call.1} parent=47 // pred_fallthru
          _
      $region48: #{tpu_custom_call.1} parent=5 // pred_fallthru
        _
    $region6: #{tpu_custom_call.1} parent=1 // loop_footer
      %s18 = sadd.s32 1, %s14
    $region7: #{tpu_custom_call.1} parent=1 // loop_footer_branch
      %13 = sbr.rel target = $region3
    $region8: #{tpu_custom_call.1} parent=1 // loop_exit
      _
    %652 = vsyncpa [#allocation3], 1
    %s653 = scalar_lea.sflag [#allocation3], 1
    %654 = vsyncpa %s653, 1

</llo_original>
